<compile_context>
chip_gen: v5e
topology: v5e:2x2
jax: 0.10.0
libtpu: 0.0.40
codegen_flags: <defaults>
</compile_context>

<pallas_src>
import functools
import math

import jax
import jax.numpy as jnp
from jax import lax
from jax.experimental import pallas as pl
from jax.experimental.pallas import tpu as pltpu


_BLOCK_BUDGET = 2 * 1024 * 1024   # bytes / VMEM block: 4 live buffers fit every gen's default scoped VMEM
_MAX_LANE_TILE = 2048             # cap on time-tile width (lanes) for the time-band pass


def _cdiv(a, b):
    return -(-a // b)


def _round_up(a, b):
    return _cdiv(a, b) * b


# --------------------------------------------------------------------------- kernels

def _time_mask_kernel(t_tile, p_ref, x_ref, o_ref):
    """Zero columns [t_start, t_start + t_width) inside one (F, t_tile) tile.

    p_ref : SMEM int32[3] = [t_start, t_width, first_band_tile]
    """
    col0 = (p_ref[2] + pl.program_id(1)) * t_tile            # global column of this tile
    x = x_ref[...]                                            # (F, W)
    col = lax.broadcasted_iota(jnp.int32, (1, x.shape[-1]), 1) + col0
    hit = (col >= p_ref[0]) & (col < p_ref[0] + p_ref[1])     # (1, W), broadcast in select
    o_ref[...] = jnp.where(hit, jnp.zeros((), x.dtype), x)


def _freq_mask_kernel(f_blk, p_ref, x_ref, o_ref):
    """Zero rows [f_start, f_start + f_width) inside one (f_blk, W) tile.

    p_ref : SMEM int32[3] = [f_start, f_width, first_band_tile]
    """
    row0 = (p_ref[2] + pl.program_id(1)) * f_blk              # global row of this tile
    x = x_ref[...]                                            # (f_blk, W)
    row = lax.broadcasted_iota(jnp.int32, (x.shape[0], 1), 0) + row0
    hit = (row >= p_ref[0]) & (row < p_ref[0] + p_ref[1])     # (f_blk, 1), broadcast in select
    o_ref[...] = jnp.where(hit, jnp.zeros((), x.dtype), x)


# --------------------------------------------------------------------------- sampling

def _sample_mask_params(cfg, key, num_freq, num_time):
    """torchaudio mask_along_axis sampling (iid_masks=False => one mask per batch):
    value ~ U[0, param), min ~ U[0, L - value), start = floor(min), end = floor(min + value)."""
    kt1, kt2, kf1, kf2 = jax.random.split(key, 4)

    def one(kv, ks, param, length):
        value = jax.random.uniform(kv, ()) * param
        minv = jax.random.uniform(ks, ()) * jnp.maximum(length - value, 0.0)
        start = jnp.floor(minv).astype(jnp.int32)
        end = jnp.floor(minv + value).astype(jnp.int32)
        return start, end - start

    t_start, t_width = one(kt1, kt2, float(cfg["time_mask"]), num_time)
    f_start, f_width = one(kf1, kf2, float(cfg["freq_mask"]), num_freq)
    return t_start, t_width, f_start, f_width


# --------------------------------------------------------------------------- wrappers

def _apply_time_mask(x, t_start, t_width, t_param):
    """Band-only time masking: grid only covers the <= n_band time tiles overlapping the mask."""
    B, F, T = x.shape
    itemsize = jnp.dtype(x.dtype).itemsize
    w_max = int(math.ceil(t_param)) + 1            # static upper bound on realized width

    if T < 128:
        t_tile = T                                  # full-dim block (always legal)
    else:
        target = max(512, min(_round_up(w_max, 128), _MAX_LANE_TILE))
        by_budget = max(128, (_BLOCK_BUDGET // (F * itemsize)) // 128 * 128)
        t_tile = max(128, min(target, (T // 128) * 128, by_budget))
    n_t_tiles = _cdiv(T, t_tile)
    n_band = min(1 + _cdiv(max(w_max - 1, 1), t_tile), n_t_tiles)

    # First band tile, clamped so that [first, first + n_band) is in range and still
    # covers the band; computed host-of-kernel (traced) and prefetched into SMEM so the
    # index_map is just a read + add.
    first_tile = jnp.minimum(t_start // t_tile, n_t_tiles - n_band).astype(jnp.int32)
    params = jnp.stack([t_start, t_width, first_tile]).astype(jnp.int32)

    block = (pl.Squeezed(), F, t_tile)
    imap = lambda b, t, p: (b, 0, p[2] + t)

    grid_spec = pltpu.PrefetchScalarGridSpec(
        num_scalar_prefetch=1,
        grid=(B, n_band),
        in_specs=[pl.BlockSpec(block, imap)],
        out_specs=pl.BlockSpec(block, imap),
    )
    return pl.pallas_call(
        functools.partial(_time_mask_kernel, t_tile),
        grid_spec=grid_spec,
        out_shape=jax.ShapeDtypeStruct(x.shape, x.dtype),
        input_output_aliases={1: 0},               # untouched tiles keep the input values
        compiler_params=pltpu.CompilerParams(
            dimension_semantics=("parallel", "arbitrary")),
    )(params, x)


def _apply_freq_mask(x, f_start, f_width, f_param):
    """Band-only frequency masking: rows [f_start, f_start+f_width) x all T."""
    B, F, T = x.shape
    itemsize = jnp.dtype(x.dtype).itemsize
    w_max = int(math.ceil(f_param)) + 1

    if F <= 8 or _round_up(w_max, 8) >= F:
        f_blk, n_f_tiles, n_band = F, 1, 1          # full-F blocks
    else:
        f_blk = _round_up(w_max, 8)                 # >= any realized width, multiple of 8
        n_f_tiles = _cdiv(F, f_blk)
        n_band = min(2, n_f_tiles)                  # band straddles at most one tile boundary

    if T < 128 or f_blk * T * itemsize <= _BLOCK_BUDGET:
        t_tile = T                                  # whole time axis in one lane-dense block
    else:
        by_budget = max(128, (_BLOCK_BUDGET // (f_blk * itemsize)) // 128 * 128)
        t_tile = max(128, min(4 * _MAX_LANE_TILE, (T // 128) * 128, by_budget))
    grid_t = _cdiv(T, t_tile)

    first_tile = jnp.minimum(f_start // f_blk, n_f_tiles - n_band).astype(jnp.int32)
    params = jnp.stack([f_start, f_width, first_tile]).astype(jnp.int32)

    block = (pl.Squeezed(), f_blk, t_tile)
    imap = lambda b, f, t, p: (b, p[2] + f, t)

    grid_spec = pltpu.PrefetchScalarGridSpec(
        num_scalar_prefetch=1,
        grid=(B, n_band, grid_t),
        in_specs=[pl.BlockSpec(block, imap)],
        out_specs=pl.BlockSpec(block, imap),
    )
    return pl.pallas_call(
        functools.partial(_freq_mask_kernel, f_blk),
        grid_spec=grid_spec,
        out_shape=jax.ShapeDtypeStruct(x.shape, x.dtype),
        input_output_aliases={1: 0},
        compiler_params=pltpu.CompilerParams(
            dimension_semantics=("parallel", "arbitrary", "arbitrary")),
    )(params, x)


def augment_forward(x, cfg, key):
    """Augment.forward(): time masking then frequency masking on x of shape (B, F, T)."""
    assert x.ndim == 3, "expected (batch, freq, time)"
    _, F, T = x.shape
    t_param = float(cfg["time_mask"])
    f_param = float(cfg["freq_mask"])
    if t_param <= 0 and f_param <= 0:
        return x

    t_start, t_width, f_start, f_width = _sample_mask_params(cfg, key, F, T)

    y = x
    if t_param > 0:
        y = _apply_time_mask(y, t_start, t_width, t_param)
    if f_param > 0:
        y = _apply_freq_mask(y, f_start, f_width, f_param)
    return y


# --------------------------------------------------------------------------- demo / test

if __name__ == "__main__":
    cfg = {"time_mask": 8, "freq_mask": 4, "noise_std": 0}

    key = jax.random.PRNGKey(0)
    k_data, k_aug = jax.random.split(key)

    B, F, T = 2, 16, 16  # small (batch, freq, time) spectrogram
    x = jax.random.normal(k_data, (B, F, T), dtype=jnp.float32)

    fwd = jax.jit(lambda xx, kk: augment_forward(xx, cfg, kk))
    y = jax.block_until_ready(fwd(x, k_aug))
    assert y.shape == x.shape and y.dtype == x.dtype

    # reference check: recompute the same mask params and apply in plain jnp
    t0, tw, f0, fw = [int(v) for v in _sample_mask_params(cfg, k_aug, F, T)]
    f_idx = jnp.arange(F)[:, None]
    t_idx = jnp.arange(T)[None, :]
    band = ((t_idx >= t0) & (t_idx < t0 + tw)) | ((f_idx >= f0) & (f_idx < f0 + fw))
    y_ref = jnp.where(band[None], 0.0, x)
    assert jnp.allclose(y, y_ref), "mismatch vs jnp reference"

    print("KERNEL_OK")
</pallas_src>

<mosaic_0001>
module attributes {stable_mosaic.version = 11 : i64} {
  func.func @_time_mask_kernel(%arg0: i32, %arg1: i32, %arg2: memref<3xi32, #tpu.memory_space<smem>>, %arg3: memref<1x16x16xf32, #tpu.memory_space<vmem>>, %arg4: memref<1x16x16xf32, #tpu.memory_space<vmem>>) attributes {dimension_semantics = [#tpu.dimension_semantics<parallel>, #tpu.dimension_semantics<arbitrary>], iteration_bounds = array<i64: 2, 1>, scalar_prefetch = 1 : i64, scratch_operands = 0 : i64, tpu.core_type = #tpu.core_type<tc>, window_params = [{transform_indices = @transform_0, window_bounds = array<i64: 1, 16, 16>}, {transform_indices = @transform_1, window_bounds = array<i64: 1, 16, 16>}]} {
    %c2 = arith.constant 2 : index
    %0 = memref.load %arg2[%c2] : memref<3xi32, #tpu.memory_space<smem>>
    %1 = arith.addi %0, %arg1 : i32
    %c16_i32 = arith.constant 16 : i32
    %2 = arith.muli %1, %c16_i32 : i32
    %c0 = arith.constant 0 : index
    %c0_0 = arith.constant 0 : index
    %c0_1 = arith.constant 0 : index
    %3 = vector.load %arg3[%c0, %c0_0, %c0_1] : memref<1x16x16xf32, #tpu.memory_space<vmem>>, vector<1x16x16xf32>
    %4 = vector.shape_cast %3 : vector<1x16x16xf32> to vector<16x16xf32>
    %5 = tpu.iota {dimensions = array<i32: 1>} : vector<1x16xi32>
    %6 = vector.broadcast %2 : i32 to vector<1x16xi32>
    %7 = arith.addi %5, %6 : vector<1x16xi32>
    %c0_2 = arith.constant 0 : index
    %8 = memref.load %arg2[%c0_2] : memref<3xi32, #tpu.memory_space<smem>>
    %9 = vector.broadcast %8 : i32 to vector<1x16xi32>
    %10 = arith.cmpi sge, %7, %9 : vector<1x16xi32>
    %c0_3 = arith.constant 0 : index
    %11 = memref.load %arg2[%c0_3] : memref<3xi32, #tpu.memory_space<smem>>
    %c1 = arith.constant 1 : index
    %12 = memref.load %arg2[%c1] : memref<3xi32, #tpu.memory_space<smem>>
    %13 = arith.addi %11, %12 : i32
    %14 = vector.broadcast %13 : i32 to vector<1x16xi32>
    %15 = arith.cmpi slt, %7, %14 : vector<1x16xi32>
    %16 = arith.andi %10, %15 : vector<1x16xi1>
    %cst = arith.constant 0.000000e+00 : f32
    %17 = vector.shape_cast %16 : vector<1x16xi1> to vector<1x16xi1>
    %18 = vector.broadcast %17 : vector<1x16xi1> to vector<16x16xi1>
    %19 = vector.broadcast %cst : f32 to vector<16x16xf32>
    %20 = arith.select %18, %19, %4 : vector<16x16xi1>, vector<16x16xf32>
    %c0_4 = arith.constant 0 : index
    %c0_5 = arith.constant 0 : index
    %c0_6 = arith.constant 0 : index
    %21 = vector.load %arg4[%c0_4, %c0_5, %c0_6] : memref<1x16x16xf32, #tpu.memory_space<vmem>>, vector<1x16x16xf32>
    %22 = vector.shape_cast %21 : vector<1x16x16xf32> to vector<16x16xf32>
    %23 = vector.shape_cast %20 : vector<16x16xf32> to vector<1x16x16xf32>
    tpu.vector_store %arg4[%c0_4, %c0_5, %c0_6], %23 {strides = array<i32>} : memref<1x16x16xf32, #tpu.memory_space<vmem>>, vector<1x16x16xf32>,
    return
  }
  func.func @transform_0(%arg0: i32, %arg1: i32, %arg2: memref<3xi32, #tpu.memory_space<smem>>) -> (i32, i32, i32) {
    %c2 = arith.constant 2 : index
    %0 = memref.load %arg2[%c2] : memref<3xi32, #tpu.memory_space<smem>>
    %1 = arith.addi %0, %arg1 : i32
    %c0_i32 = arith.constant 0 : i32
    %c0_i32_0 = arith.constant 0 : i32
    return %arg0, %c0_i32, %1 : i32, i32, i32
  }
  func.func @transform_1(%arg0: i32, %arg1: i32, %arg2: memref<3xi32, #tpu.memory_space<smem>>) -> (i32, i32, i32) {
    %c2 = arith.constant 2 : index
    %0 = memref.load %arg2[%c2] : memref<3xi32, #tpu.memory_space<smem>>
    %1 = arith.addi %0, %arg1 : i32
    %c0_i32 = arith.constant 0 : i32
    %c0_i32_0 = arith.constant 0 : i32
    return %arg0, %c0_i32, %1 : i32, i32, i32
  }
}

module attributes {stable_mosaic.version = 11 : i64} {
  func.func @_freq_mask_kernel(%arg0: i32, %arg1: i32, %arg2: i32, %arg3: memref<3xi32, #tpu.memory_space<smem>>, %arg4: memref<1x8x16xf32, #tpu.memory_space<vmem>>, %arg5: memref<1x8x16xf32, #tpu.memory_space<vmem>>) attributes {dimension_semantics = [#tpu.dimension_semantics<parallel>, #tpu.dimension_semantics<arbitrary>, #tpu.dimension_semantics<arbitrary>], iteration_bounds = array<i64: 2, 2, 1>, scalar_prefetch = 1 : i64, scratch_operands = 0 : i64, tpu.core_type = #tpu.core_type<tc>, window_params = [{transform_indices = @transform_0, window_bounds = array<i64: 1, 8, 16>}, {transform_indices = @transform_1, window_bounds = array<i64: 1, 8, 16>}]} {
    %c2 = arith.constant 2 : index
    %0 = memref.load %arg3[%c2] : memref<3xi32, #tpu.memory_space<smem>>
    %1 = arith.addi %0, %arg1 : i32
    %c8_i32 = arith.constant 8 : i32
    %2 = arith.muli %1, %c8_i32 : i32
    %c0 = arith.constant 0 : index
    %c0_0 = arith.constant 0 : index
    %c0_1 = arith.constant 0 : index
    %3 = vector.load %arg4[%c0, %c0_0, %c0_1] : memref<1x8x16xf32, #tpu.memory_space<vmem>>, vector<1x8x16xf32>
    %4 = vector.shape_cast %3 : vector<1x8x16xf32> to vector<8x16xf32>
    %5 = tpu.iota {dimensions = array<i32: 0>} : vector<8x1xi32>
    %6 = vector.broadcast %2 : i32 to vector<8x1xi32>
    %7 = arith.addi %5, %6 : vector<8x1xi32>
    %c0_2 = arith.constant 0 : index
    %8 = memref.load %arg3[%c0_2] : memref<3xi32, #tpu.memory_space<smem>>
    %9 = vector.broadcast %8 : i32 to vector<8x1xi32>
    %10 = arith.cmpi sge, %7, %9 : vector<8x1xi32>
    %c0_3 = arith.constant 0 : index
    %11 = memref.load %arg3[%c0_3] : memref<3xi32, #tpu.memory_space<smem>>
    %c1 = arith.constant 1 : index
    %12 = memref.load %arg3[%c1] : memref<3xi32, #tpu.memory_space<smem>>
    %13 = arith.addi %11, %12 : i32
    %14 = vector.broadcast %13 : i32 to vector<8x1xi32>
    %15 = arith.cmpi slt, %7, %14 : vector<8x1xi32>
    %16 = arith.andi %10, %15 : vector<8x1xi1>
    %cst = arith.constant 0.000000e+00 : f32
    %17 = vector.shape_cast %16 : vector<8x1xi1> to vector<8x1xi1>
    %18 = vector.broadcast %17 : vector<8x1xi1> to vector<8x16xi1>
    %19 = vector.broadcast %cst : f32 to vector<8x16xf32>
    %20 = arith.select %18, %19, %4 : vector<8x16xi1>, vector<8x16xf32>
    %c0_4 = arith.constant 0 : index
    %c0_5 = arith.constant 0 : index
    %c0_6 = arith.constant 0 : index
    %21 = vector.load %arg5[%c0_4, %c0_5, %c0_6] : memref<1x8x16xf32, #tpu.memory_space<vmem>>, vector<1x8x16xf32>
    %22 = vector.shape_cast %21 : vector<1x8x16xf32> to vector<8x16xf32>
    %23 = vector.shape_cast %20 : vector<8x16xf32> to vector<1x8x16xf32>
    tpu.vector_store %arg5[%c0_4, %c0_5, %c0_6], %23 {strides = array<i32>} : memref<1x8x16xf32, #tpu.memory_space<vmem>>, vector<1x8x16xf32>,
    return
  }
  func.func @transform_0(%arg0: i32, %arg1: i32, %arg2: i32, %arg3: memref<3xi32, #tpu.memory_space<smem>>) -> (i32, i32, i32) {
    %c2 = arith.constant 2 : index
    %0 = memref.load %arg3[%c2] : memref<3xi32, #tpu.memory_space<smem>>
    %1 = arith.addi %0, %arg1 : i32
    %c0_i32 = arith.constant 0 : i32
    return %arg0, %1, %arg2 : i32, i32, i32
  }
  func.func @transform_1(%arg0: i32, %arg1: i32, %arg2: i32, %arg3: memref<3xi32, #tpu.memory_space<smem>>) -> (i32, i32, i32) {
    %c2 = arith.constant 2 : index
    %0 = memref.load %arg3[%c2] : memref<3xi32, #tpu.memory_space<smem>>
    %1 = arith.addi %0, %arg1 : i32
    %c0_i32 = arith.constant 0 : i32
    return %arg0, %1, %arg2 : i32, i32, i32
  }
}

</mosaic_0001>

<llo_original>
// kernel: _lambda_.3
$region0: #{_lambda_.3}
  #allocation0 [shape = 'u32[]', space=smem, size = 0x4, offset = 0x4, fixed_abs, tag = 'smem constant byte address 0x4 - core index']
  #allocation1 [shape = 'u32[72,128]{1,0:T(1,128)}', space=vmem, size = 0x9000, scoped, tag = 'internal scratch']
  #allocation2 [shape = 's32[1]{0}', space=sflag, size = 0x4, scoped, tag = 'scoped memory for _lambda_.3']
  #allocation3 [shape = 'u8[512]{0}', space=smem, size = 0x200, scoped, tag = 'prefetched SMEM operand 0']
  %s0 = inlined_call_operand.vmem [shape: s32[3], index: 0, kind: input, shape index: {}]
  %s1 = inlined_call_operand.hbm [shape: f32[2,16,16], index: 1, kind: input, shape index: {}, may-alias: {1,2}]
  %s2 = inlined_call_operand.hbm [shape: f32[2,16,16], index: 2, kind: output, shape index: {}, may-alias: {1,2}]
  %s3 = sld [smem:[#allocation0]]
  $region41: #{_lambda_.3} parent=0
    _
  %s5 = ssub.s32 1, %s3
  %s6 = scalar_select 0, %s5, %s3
  %s8 = sshll.u32 %s0, 4
  %s9 = int_to_ptr.vmem [resolvable:$true] %s8
  %11 = dma.vmem_to_smem %s9, 16, [#allocation3], [#allocation2]
  %13 = dma.done [#allocation2], 16
  %14 = sfence
  $region1: #{_lambda_.3} parent=0
    #allocation4 [shape = 'u8[8192]{0}', space=vmem, size = 0x2000, scoped, tag = 'input window, operand 1']
    #allocation5 [shape = 's32[2]{0}', space=sflag, size = 0x8, scoped, tag = 'scoped memory for _lambda_.3']
    #allocation6 [shape = 's32[2]{0}', space=sflag, size = 0x8, scoped, tag = 'scoped memory for _lambda_.3']
    #allocation7 [shape = 'u8[8192]{0}', space=vmem, size = 0x2000, scoped, tag = 'output window, operand 0']
    %15 = vsyncpa [#allocation5], 0
    %s16 = scalar_lea.sflag [#allocation5], 1
    %17 = vsyncpa %s16, 0
    %18 = vsyncpa [#allocation6], 0
    %s19 = scalar_lea.sflag [#allocation6], 1
    %20 = vsyncpa %s19, 0
    loop: start=0, step=1, limit=6
    $region2: #{_lambda_.3} parent=1 // loop_pre_header
      _
    $region3: #{_lambda_.3} parent=1 // loop_header
      %s22 = sphi 0, %s26
      %p23 = scmp.ge.s32.totalorder %s22, 6
      %s29 = sphi 0, %s48
      %s30 = sphi 0, %s44
      %s31 = sphi 0, %s40
      %s32 = sphi 0, %s29
      %s33 = sphi 0, %s30
      %s34 = sphi 0, %s31
      %s35 = sphi 0, %s32
      %s36 = sphi 0, %s33
      %s37 = sphi 0, %s34
      %s59 = sphi 0, %s61
      %s62 = sphi 0, %s59
      %s63 = sphi 0, %s62
      %s79 = sphi 0, %s63
      %s93 = sphi 0, %s95
      %s96 = sphi 0, %s93
      %s97 = sphi 0, %s96
      %s113 = sphi 0, %s97
    $region4: #{_lambda_.3} parent=1 // loop_header_branch
      %25 = sbr.rel (%p23) target = $region8
    $region5: #{_lambda_.3} parent=1 // loop_body
      %s27 = ssub.s32 %s22, 1
      %s28 = ssub.s32 %s22, 2
      %s38 = sadd.s32 1, %s31
      %p39 = scmp.ge.s32.totalorder %s38, 1
      %s40 = scalar_select %p39, 0, %s38
      %s41 = sadd.s32 1, %s30
      %s42 = scalar_select %p39, %s41, %s30
      %p43 = scmp.ge.s32.totalorder %s42, 2
      %s44 = scalar_select %p43, 0, %s42
      %s45 = sadd.s32 1, %s29
      %s46 = scalar_select %p43, %s45, %s29
      %p47 = scmp.ge.s32.totalorder %s46, 2
      %s48 = scalar_select %p47, 0, %s46
      %s49 = sld [smem:[#allocation3 + $0x2]]
      %s50 = sadd.s32 %s49, %s30
      %s51 = sld [smem:[#allocation3 + $0x2]]
      %s52 = sadd.s32 %s51, %s44
      %s53 = ssub.s32 %s29, %s48
      %s54 = ssub.s32 %s50, %s52
      %s55 = sor.u32 %s53, %s54
      %s56 = ssub.s32 %s31, %s40
      %s57 = sor.u32 %s55, %s56
      %p58 = scmp.eq.s32.totalorder %s57, 0
      %s60 = sadd.s32 %s59, 1
      %s61 = scalar_select %p58, %s59, %s60
      %p64 = pneg %p58
      %p65 = scmp.eq.s32.totalorder %s22, 3
      %p66 = por %p64, %p65
      %p67 = scmp.ne.s32.totalorder %s59, %s62
      %p68 = scmp.eq.s32.totalorder %s22, 0
      %p69 = por %p67, %p68
      %p70 = scmp.ne.s32.totalorder %s59, %s62
      %p71 = scmp.eq.s32.totalorder %s27, 3
      %p72 = por %p70, %p71
      %p73 = scmp.ne.s32.totalorder %s62, %s63
      %p74 = scmp.eq.s32.totalorder %s27, 0
      %p75 = por %p73, %p74
      %p76 = scmp.ne.s32.totalorder %s62, %s63
      %p77 = scmp.eq.s32.totalorder %s28, 3
      %p78 = por %p76, %p77
      %p80 = scmp.ne.s32.totalorder %s63, %s79
      %p81 = scmp.eq.s32.totalorder %s28, 0
      %p82 = por %p80, %p81
      %s83 = sld [smem:[#allocation3 + $0x2]]
      %s84 = sadd.s32 %s83, %s30
      %s85 = sld [smem:[#allocation3 + $0x2]]
      %s86 = sadd.s32 %s85, %s44
      %s87 = ssub.s32 %s29, %s48
      %s88 = ssub.s32 %s84, %s86
      %s89 = sor.u32 %s87, %s88
      %s90 = ssub.s32 %s31, %s40
      %s91 = sor.u32 %s89, %s90
      %p92 = scmp.eq.s32.totalorder %s91, 0
      %s94 = sadd.s32 %s93, 1
      %s95 = scalar_select %p92, %s93, %s94
      %p98 = pneg %p92
      %p99 = scmp.eq.s32.totalorder %s22, 3
      %p100 = por %p98, %p99
      %p101 = scmp.ne.s32.totalorder %s93, %s96
      %p102 = scmp.eq.s32.totalorder %s22, 0
      %p103 = por %p101, %p102
      %p104 = scmp.ne.s32.totalorder %s93, %s96
      %p105 = scmp.eq.s32.totalorder %s27, 3
      %p106 = por %p104, %p105
      %p107 = scmp.ne.s32.totalorder %s96, %s97
      %p108 = scmp.eq.s32.totalorder %s27, 0
      %p109 = por %p107, %p108
      %p110 = scmp.ne.s32.totalorder %s96, %s97
      %p111 = scmp.eq.s32.totalorder %s28, 3
      %p112 = por %p110, %p111
      %p114 = scmp.ne.s32.totalorder %s97, %s113
      %p115 = scmp.eq.s32.totalorder %s28, 0
      %p116 = por %p114, %p115
      %p117 = scmp.le.s32.totalorder 1, %s22
      %p118 = scmp.lt.s32.totalorder %s22, 5
      %p119 = pnand %p117, %p118
      %p120 = pneg %p119
      // Predicated region
      $region9: #{_lambda_.3} parent=5 // pred_check
        _
      $region10: #{_lambda_.3} parent=5 // pred_check_branch
        %122 = sbr.rel (%p119) target = $region12
      $region11: #{_lambda_.3} parent=5 // pred_region
        %s123 = ssub.s32 %s22, 1
      $region12: #{_lambda_.3} parent=5 // pred_fallthru
        _
      %p124 = scmp.lt.s32.totalorder %s22, 4
      // Predicated region
      $region13: #{_lambda_.3} parent=5 // pred_check
        %p125 = pneg %p124
      $region14: #{_lambda_.3} parent=5 // pred_check_branch
        %127 = sbr.rel (%p125) target = $region16
      $region15: #{_lambda_.3} parent=5 // pred_region
        // Predicated region
        $region17: #{_lambda_.3} parent=15 // pred_check
          %p128 = pneg %p69
        $region18: #{_lambda_.3} parent=15 // pred_check_branch
          %130 = sbr.rel (%p128) target = $region20
        $region19: #{_lambda_.3} parent=15 // pred_region
          %s131 = sand.u32 %s59, 1
          %s132 = scalar_lea.sflag [#allocation5], %s131
          %s133 = sand.u32 %s59, 1
          %s134 = smul.addr %s133, 8
          %s135 = scalar_lea.vmem [#allocation4], %s134
          %s136 = sld [smem:[#allocation3 + $0x2]]
          %s137 = sadd.s32 %s136, %s30
          %139 = vsyncadd %s132, 0
          %s140 = sadd.s32 %s31, %s137
          %s141 = smul.addr %s29, 2
          %s142 = sadd.s32 %s140, %s141
          %s143 = smul.addr %s142, 8
          %s144 = scalar_lea.hbm %s1, %s143
          %s146 = sshll.u32 %s144, 4
          %s147 = int_to_ptr.hbm [resolvable:$true] %s146
          %s148 = sshll.u32 %s135, 4
          %s149 = int_to_ptr.vmem [resolvable:$true] %s148
          %151 = dma.hbm_to_vmem [thread:$0]  %s147, 128, %s149, %s132
        $region20: #{_lambda_.3} parent=15 // pred_fallthru
          _
      $region16: #{_lambda_.3} parent=5 // pred_fallthru
        _
      %p152 = scmp.le.s32.totalorder 1, %s22
      %p153 = scmp.lt.s32.totalorder %s22, 5
      %p154 = pnand %p152, %p153
      %p155 = pneg %p154
      // Predicated region
      $region21: #{_lambda_.3} parent=5 // pred_check
        _
      $region22: #{_lambda_.3} parent=5 // pred_check_branch
        %157 = sbr.rel (%p154) target = $region24
      $region23: #{_lambda_.3} parent=5 // pred_region
        %s158 = ssub.s32 %s22, 1
        %s159 = sand.u32 %s62, 1
        %s160 = scalar_lea.sflag [#allocation5], %s159
        %s161 = sand.u32 %s62, 1
        %s162 = smul.addr %s161, 8
        %s163 = scalar_lea.vmem [#allocation4], %s162
        // Predicated region
        $region25: #{_lambda_.3} parent=23 // pred_check
          %p164 = pneg %p75
        $region26: #{_lambda_.3} parent=23 // pred_check_branch
          %166 = sbr.rel (%p164) target = $region28
        $region27: #{_lambda_.3} parent=23 // pred_region
          %168 = dma.done %s160, 128
        $region28: #{_lambda_.3} parent=23 // pred_fallthru
          _
        %s169 = sand.u32 %s62, 1
        %s170 = scalar_lea.sflag [#allocation5], %s169
        %s171 = sand.u32 %s62, 1
        %s172 = smul.addr %s171, 8
        %s173 = scalar_lea.vmem [#allocation4], %s172
        %p174 = pneg %p75
        %p175 = pneg %p72
        %p176 = pneg %p109
        %p177 = pneg %p106
        %s178 = sand.u32 %s96, 1
        %s179 = scalar_lea.sflag [#allocation6], %s178
        %s180 = sand.u32 %s96, 1
        %s181 = smul.addr %s180, 8
        %s182 = scalar_lea.vmem [#allocation7], %s181
        %s183 = sld [smem:[#allocation3 + $0x2]]
        %s184 = sadd.s32 %s183, %s33
        %s185 = sld [smem:[#allocation3 + $0x2]]
        %s186 = sadd.s32 %s185, %s33
        %s187 = sld [smem:[#allocation3 + $0x2]]
        %s188 = sadd.s32 %s187, %s33
        %s189 = smul.u32 %s188, 8
        %v190 = vld [vmem:[%s163] sm:$0xff]
        %v191 = vlaneseq
        %v192 = vshrl.u32 %v191, 7
        %v193 = vstv %s189
        %v194 = vadd.s32 %v192, %v193
        %s195 = sld [smem:[#allocation3]]
        %v196 = vstv %s195
        %vm197 = vcmp.ge.s32.totalorder %v194, %v196
        %s198 = sld [smem:[#allocation3 + $0x1]]
        %s199 = sadd.s32 %s195, %s198
        %v200 = vstv %s199
        %vm201 = vcmp.lt.s32.totalorder %v194, %v200
        %vm202 = vmand %vm197, %vm201
        %v203 = vsel %vm202, 1, 0
        %vm204 = vcmp.eq.s32.totalorder %v203, 1
        %v205 = vsel %vm204, 0.0, %v190
        %vm206 = vcmask 130048
        %207 = vst.msk [vmem:[%s182] sm:$0xff] %vm206, %v205
        %s208 = sand.u32 %s96, 1
        %s209 = scalar_lea.sflag [#allocation6], %s208
        %s210 = sand.u32 %s96, 1
        %s211 = smul.addr %s210, 8
        %s212 = scalar_lea.vmem [#allocation7], %s211
        // Predicated region
        $region29: #{_lambda_.3} parent=23 // pred_check
          %p213 = pneg %p106
        $region30: #{_lambda_.3} parent=23 // pred_check_branch
          %215 = sbr.rel (%p213) target = $region32
        $region31: #{_lambda_.3} parent=23 // pred_region
          %s216 = sld [smem:[#allocation3 + $0x2]]
          %s217 = sadd.s32 %s216, %s33
          %219 = vsyncadd %s209, 0
          %s220 = sadd.s32 %s34, %s217
          %s221 = smul.addr %s32, 2
          %s222 = sadd.s32 %s220, %s221
          %s223 = smul.addr %s222, 8
          %s224 = scalar_lea.hbm %s2, %s223
          %s226 = sshll.u32 %s212, 4
          %s227 = int_to_ptr.vmem [resolvable:$true] %s226
          %s228 = sshll.u32 %s224, 4
          %s229 = int_to_ptr.hbm [resolvable:$true] %s228
          %231 = dma.vmem_to_hbm [thread:$0]  %s227, 128, %s229, %s209
        $region32: #{_lambda_.3} parent=23 // pred_fallthru
          _
      $region24: #{_lambda_.3} parent=5 // pred_fallthru
        _
      %p232 = scmp.le.s32.totalorder 2, %s22
      // Predicated region
      $region33: #{_lambda_.3} parent=5 // pred_check
        %p233 = pneg %p232
      $region34: #{_lambda_.3} parent=5 // pred_check_branch
        %235 = sbr.rel (%p233) target = $region36
      $region35: #{_lambda_.3} parent=5 // pred_region
        %s236 = ssub.s32 %s22, 2
        // Predicated region
        $region37: #{_lambda_.3} parent=35 // pred_check
          %p237 = pneg %p112
        $region38: #{_lambda_.3} parent=35 // pred_check_branch
          %239 = sbr.rel (%p237) target = $region40
        $region39: #{_lambda_.3} parent=35 // pred_region
          %s240 = sand.u32 %s97, 1
          %s241 = scalar_lea.sflag [#allocation6], %s240
          %s242 = sand.u32 %s97, 1
          %s243 = smul.addr %s242, 8
          %s244 = scalar_lea.vmem [#allocation7], %s243
          %246 = dma.done %s241, 128
        $region40: #{_lambda_.3} parent=35 // pred_fallthru
          _
      $region36: #{_lambda_.3} parent=5 // pred_fallthru
        _
    $region6: #{_lambda_.3} parent=1 // loop_footer
      %s26 = sadd.s32 1, %s22
    $region7: #{_lambda_.3} parent=1 // loop_footer_branch
      %21 = sbr.rel target = $region3
    $region8: #{_lambda_.3} parent=1 // loop_exit
      _
    %247 = vsyncpa [#allocation5], 1
    %s248 = scalar_lea.sflag [#allocation5], 1
    %249 = vsyncpa %s248, 1
    %250 = vsyncpa [#allocation6], 1
    %s251 = scalar_lea.sflag [#allocation6], 1
    %252 = vsyncpa %s251, 1

// kernel: _lambda_.2
$region0: #{_lambda_.2}
  #allocation0 [shape = 'u32[]', space=smem, size = 0x4, offset = 0x4, fixed_abs, tag = 'smem constant byte address 0x4 - core index']
  #allocation1 [shape = 'u32[72,128]{1,0:T(1,128)}', space=vmem, size = 0x9000, scoped, tag = 'internal scratch']
  #allocation2 [shape = 's32[1]{0}', space=sflag, size = 0x4, scoped, tag = 'scoped memory for _lambda_.2']
  #allocation3 [shape = 'u8[512]{0}', space=smem, size = 0x200, scoped, tag = 'prefetched SMEM operand 0']
  %s0 = inlined_call_operand.vmem [shape: s32[3], index: 0, kind: input, shape index: {}]
  %s1 = inlined_call_operand.vmem [shape: f32[2,16,16], index: 1, kind: input, shape index: {}, may-alias: {1,2}]
  %s2 = inlined_call_operand.vmem [shape: f32[2,16,16], index: 2, kind: output, shape index: {}, may-alias: {1,2}]
  %s3 = sld [smem:[#allocation0]]
  $region37: #{_lambda_.2} parent=0
    _
  %s5 = ssub.s32 1, %s3
  %s6 = scalar_select 0, %s5, %s3
  %s8 = sshll.u32 %s0, 4
  %s9 = int_to_ptr.vmem [resolvable:$true] %s8
  %11 = dma.vmem_to_smem %s9, 16, [#allocation3], [#allocation2]
  %13 = dma.done [#allocation2], 16
  %14 = sfence
  loop: start=0, step=1, limit=4
  $region2: #{_lambda_.2} parent=0 // loop_pre_header
    _
  $region3: #{_lambda_.2} parent=0 // loop_header
    %s16 = sphi 0, %s20
    %p17 = scmp.ge.s32.totalorder %s16, 4
    %s23 = sphi 0, %s35
    %s24 = sphi 0, %s31
    %s25 = sphi 0, %s23
    %s26 = sphi 0, %s24
    %s27 = sphi 0, %s25
    %s28 = sphi 0, %s26
    %s44 = sphi 0, %s46
    %s47 = sphi 0, %s44
    %s48 = sphi 0, %s47
    %s64 = sphi 0, %s48
    %s76 = sphi 0, %s78
    %s79 = sphi 0, %s76
    %s80 = sphi 0, %s79
    %s96 = sphi 0, %s80
  $region4: #{_lambda_.2} parent=0 // loop_header_branch
    %19 = sbr.rel (%p17) target = $region8
  $region5: #{_lambda_.2} parent=0 // loop_body
    %s21 = ssub.s32 %s16, 1
    %s22 = ssub.s32 %s16, 2
    %s29 = sadd.s32 1, %s24
    %p30 = scmp.ge.s32.totalorder %s29, 1
    %s31 = scalar_select %p30, 0, %s29
    %s32 = sadd.s32 1, %s23
    %s33 = scalar_select %p30, %s32, %s23
    %p34 = scmp.ge.s32.totalorder %s33, 2
    %s35 = scalar_select %p34, 0, %s33
    %s36 = sld [smem:[#allocation3 + $0x2]]
    %s37 = sadd.s32 %s36, %s24
    %s38 = sld [smem:[#allocation3 + $0x2]]
    %s39 = sadd.s32 %s38, %s31
    %s40 = ssub.s32 %s23, %s35
    %s41 = ssub.s32 %s37, %s39
    %s42 = sor.u32 %s40, %s41
    %p43 = scmp.eq.s32.totalorder %s42, 0
    %s45 = sadd.s32 %s44, 1
    %s46 = scalar_select %p43, %s44, %s45
    %p49 = pneg %p43
    %p50 = scmp.eq.s32.totalorder %s16, 1
    %p51 = por %p49, %p50
    %p52 = scmp.ne.s32.totalorder %s44, %s47
    %p53 = scmp.eq.s32.totalorder %s16, 0
    %p54 = por %p52, %p53
    %p55 = scmp.ne.s32.totalorder %s44, %s47
    %p56 = scmp.eq.s32.totalorder %s21, 1
    %p57 = por %p55, %p56
    %p58 = scmp.ne.s32.totalorder %s47, %s48
    %p59 = scmp.eq.s32.totalorder %s21, 0
    %p60 = por %p58, %p59
    %p61 = scmp.ne.s32.totalorder %s47, %s48
    %p62 = scmp.eq.s32.totalorder %s22, 1
    %p63 = por %p61, %p62
    %p65 = scmp.ne.s32.totalorder %s48, %s64
    %p66 = scmp.eq.s32.totalorder %s22, 0
    %p67 = por %p65, %p66
    %s68 = sld [smem:[#allocation3 + $0x2]]
    %s69 = sadd.s32 %s68, %s24
    %s70 = sld [smem:[#allocation3 + $0x2]]
    %s71 = sadd.s32 %s70, %s31
    %s72 = ssub.s32 %s23, %s35
    %s73 = ssub.s32 %s69, %s71
    %s74 = sor.u32 %s72, %s73
    %p75 = scmp.eq.s32.totalorder %s74, 0
    %s77 = sadd.s32 %s76, 1
    %s78 = scalar_select %p75, %s76, %s77
    %p81 = pneg %p75
    %p82 = scmp.eq.s32.totalorder %s16, 1
    %p83 = por %p81, %p82
    %p84 = scmp.ne.s32.totalorder %s76, %s79
    %p85 = scmp.eq.s32.totalorder %s16, 0
    %p86 = por %p84, %p85
    %p87 = scmp.ne.s32.totalorder %s76, %s79
    %p88 = scmp.eq.s32.totalorder %s21, 1
    %p89 = por %p87, %p88
    %p90 = scmp.ne.s32.totalorder %s79, %s80
    %p91 = scmp.eq.s32.totalorder %s21, 0
    %p92 = por %p90, %p91
    %p93 = scmp.ne.s32.totalorder %s79, %s80
    %p94 = scmp.eq.s32.totalorder %s22, 1
    %p95 = por %p93, %p94
    %p97 = scmp.ne.s32.totalorder %s80, %s96
    %p98 = scmp.eq.s32.totalorder %s22, 0
    %p99 = por %p97, %p98
    %p100 = scmp.le.s32.totalorder 1, %s16
    %p101 = scmp.lt.s32.totalorder %s16, 3
    %p102 = pnand %p100, %p101
    %p103 = pneg %p102
    // Predicated region
    $region9: #{_lambda_.2} parent=5 // pred_check
      _
    $region10: #{_lambda_.2} parent=5 // pred_check_branch
      %105 = sbr.rel (%p102) target = $region12
    $region11: #{_lambda_.2} parent=5 // pred_region
      %s106 = ssub.s32 %s16, 1
    $region12: #{_lambda_.2} parent=5 // pred_fallthru
      _
    %p107 = scmp.lt.s32.totalorder %s16, 2
    // Predicated region
    $region13: #{_lambda_.2} parent=5 // pred_check
      %p108 = pneg %p107
    $region14: #{_lambda_.2} parent=5 // pred_check_branch
      %110 = sbr.rel (%p108) target = $region16
    $region15: #{_lambda_.2} parent=5 // pred_region
      // Predicated region
      $region17: #{_lambda_.2} parent=15 // pred_check
        %p111 = pneg %p54
      $region18: #{_lambda_.2} parent=15 // pred_check_branch
        %113 = sbr.rel (%p111) target = $region20
      $region19: #{_lambda_.2} parent=15 // pred_region
        %s114 = sld [smem:[#allocation3 + $0x2]]
        %s115 = sadd.s32 %s114, %s24
        %p116 = scmp.lt.s32.totalorder %s23, 1
        %s117 = scalar_select %p116, %s23, 1
        %p118 = scmp.lt.s32.totalorder %s115, 0
        %s119 = scalar_select %p118, %s115, 0
        %s120 = smul.addr %s117, 2
        %s121 = sadd.s32 %s119, %s120
        %s122 = smul.addr %s121, 8
        %s123 = scalar_lea.vmem %s1, %s122
        %s124 = sld [smem:[#allocation3 + $0x2]]
        %s125 = sadd.s32 %s124, %s24
      $region20: #{_lambda_.2} parent=15 // pred_fallthru
        _
    $region16: #{_lambda_.2} parent=5 // pred_fallthru
      _
    %p126 = scmp.le.s32.totalorder 1, %s16
    %p127 = scmp.lt.s32.totalorder %s16, 3
    %p128 = pnand %p126, %p127
    %p129 = pneg %p128
    // Predicated region
    $region21: #{_lambda_.2} parent=5 // pred_check
      _
    $region22: #{_lambda_.2} parent=5 // pred_check_branch
      %131 = sbr.rel (%p128) target = $region24
    $region23: #{_lambda_.2} parent=5 // pred_region
      %s132 = ssub.s32 %s16, 1
      %s133 = sld [smem:[#allocation3 + $0x2]]
      %s134 = sadd.s32 %s133, %s26
      %p135 = scmp.lt.s32.totalorder %s25, 1
      %s136 = scalar_select %p135, %s25, 1
      %p137 = scmp.lt.s32.totalorder %s134, 0
      %s138 = scalar_select %p137, %s134, 0
      %s139 = smul.addr %s136, 2
      %s140 = sadd.s32 %s138, %s139
      %s141 = smul.addr %s140, 8
      %s142 = scalar_lea.vmem %s1, %s141
      %p143 = pneg %p60
      %p144 = pneg %p57
      %p145 = pneg %p92
      %p146 = pneg %p89
      %s147 = sld [smem:[#allocation3 + $0x2]]
      %s148 = sadd.s32 %s147, %s26
      %p149 = scmp.lt.s32.totalorder %s25, 1
      %s150 = scalar_select %p149, %s25, 1
      %p151 = scmp.lt.s32.totalorder %s148, 0
      %s152 = scalar_select %p151, %s148, 0
      %s153 = smul.addr %s150, 2
      %s154 = sadd.s32 %s152, %s153
      %s155 = smul.addr %s154, 8
      %s156 = scalar_lea.vmem %s2, %s155
      %s157 = sld [smem:[#allocation3 + $0x2]]
      %s158 = sadd.s32 %s157, %s26
      %p159 = scmp.lt.s32.totalorder %s25, 1
      %s160 = scalar_select %p159, %s25, 1
      %p161 = scmp.lt.s32.totalorder %s158, 0
      %s162 = scalar_select %p161, %s158, 0
      %s163 = smul.addr %s160, 2
      %s164 = sadd.s32 %s162, %s163
      %s165 = smul.addr %s164, 8
      %s166 = scalar_lea.vmem %s1, %s165
      %s167 = sld [smem:[#allocation3 + $0x2]]
      %s168 = sadd.s32 %s167, %s26
      %s169 = sld [smem:[#allocation3 + $0x2]]
      %s170 = sadd.s32 %s169, %s26
      %p171 = scmp.lt.s32.totalorder %s25, 1
      %s172 = scalar_select %p171, %s25, 1
      %p173 = scmp.lt.s32.totalorder %s170, 0
      %s174 = scalar_select %p173, %s170, 0
      %s175 = smul.addr %s172, 2
      %s176 = sadd.s32 %s174, %s175
      %s177 = smul.addr %s176, 8
      %s178 = scalar_lea.vmem %s2, %s177
      %s179 = sld [smem:[#allocation3 + $0x2]]
      %s180 = sadd.s32 %s179, %s26
      %s181 = sld [smem:[#allocation3 + $0x2]]
      %s182 = sadd.s32 %s181, %s26
      %s183 = smul.u32 %s182, 16
      %v184 = vld [vmem:[%s166] sm:$0xff]
      %v185 = vld [vmem:[%s166 + $0x8] sm:$0xff]
      %v186 = vlaneseq
      %v187 = vand.u32 %v186, 127
      %v188 = vstv %s183
      %v189 = vadd.s32 %v187, %v188
      %s190 = sld [smem:[#allocation3]]
      %v191 = vstv %s190
      %vm192 = vcmp.ge.s32.totalorder %v189, %v191
      %s193 = sld [smem:[#allocation3 + $0x1]]
      %s194 = sadd.s32 %s190, %s193
      %v195 = vstv %s194
      %vm196 = vcmp.lt.s32.totalorder %v189, %v195
      %vm197 = vmand %vm192, %vm196
      %v198 = vsel %vm197, 1, 0
      %vm199 = vcmp.eq.s32.totalorder %v198, 1
      %v200 = vsel %vm199, 0.0, %v184
      %v201 = vsel %vm199, 0.0, %v185
      %vm202 = vcmask 130048
      %203 = vst.msk [vmem:[%s178] sm:$0xff] %vm202, %v200
      %204 = vst.msk [vmem:[%s178 + $0x8] sm:$0xff] %vm202, %v201
      %s205 = sld [smem:[#allocation3 + $0x2]]
      %s206 = sadd.s32 %s205, %s26
      %p207 = scmp.lt.s32.totalorder %s25, 1
      %s208 = scalar_select %p207, %s25, 1
      %p209 = scmp.lt.s32.totalorder %s206, 0
      %s210 = scalar_select %p209, %s206, 0
      %s211 = smul.addr %s208, 2
      %s212 = sadd.s32 %s210, %s211
      %s213 = smul.addr %s212, 8
      %s214 = scalar_lea.vmem %s2, %s213
      // Predicated region
      $region25: #{_lambda_.2} parent=23 // pred_check
        %p215 = pneg %p89
      $region26: #{_lambda_.2} parent=23 // pred_check_branch
        %217 = sbr.rel (%p215) target = $region28
      $region27: #{_lambda_.2} parent=23 // pred_region
        %s218 = sld [smem:[#allocation3 + $0x2]]
        %s219 = sadd.s32 %s218, %s26
      $region28: #{_lambda_.2} parent=23 // pred_fallthru
        _
    $region24: #{_lambda_.2} parent=5 // pred_fallthru
      _
    %p220 = scmp.le.s32.totalorder 2, %s16
    // Predicated region
    $region29: #{_lambda_.2} parent=5 // pred_check
      %p221 = pneg %p220
    $region30: #{_lambda_.2} parent=5 // pred_check_branch
      %223 = sbr.rel (%p221) target = $region32
    $region31: #{_lambda_.2} parent=5 // pred_region
      %s224 = ssub.s32 %s16, 2
      // Predicated region
      $region33: #{_lambda_.2} parent=31 // pred_check
        %p225 = pneg %p95
      $region34: #{_lambda_.2} parent=31 // pred_check_branch
        %227 = sbr.rel (%p225) target = $region36
      $region35: #{_lambda_.2} parent=31 // pred_region
        %s228 = sld [smem:[#allocation3 + $0x2]]
        %s229 = sadd.s32 %s228, %s28
        %p230 = scmp.lt.s32.totalorder %s27, 1
        %s231 = scalar_select %p230, %s27, 1
        %p232 = scmp.lt.s32.totalorder %s229, 0
        %s233 = scalar_select %p232, %s229, 0
        %s234 = smul.addr %s231, 2
        %s235 = sadd.s32 %s233, %s234
        %s236 = smul.addr %s235, 8
        %s237 = scalar_lea.vmem %s2, %s236
      $region36: #{_lambda_.2} parent=31 // pred_fallthru
        _
    $region32: #{_lambda_.2} parent=5 // pred_fallthru
      _
  $region6: #{_lambda_.2} parent=0 // loop_footer
    %s20 = sadd.s32 1, %s16
  $region7: #{_lambda_.2} parent=0 // loop_footer_branch
    %15 = sbr.rel target = $region3
  $region8: #{_lambda_.2} parent=0 // loop_exit
    _

</llo_original>
